<compile_context>
chip_gen: v7x
topology: tpu7x:2x2x1
jax: 0.10.0
libtpu: 0.0.40
codegen_flags: <defaults>
</compile_context>

<pallas_src>
import jax
import jax.numpy as jnp
from jax.experimental import pallas as pl
from jax.experimental.pallas import tpu as pltpu


def qnet_kernel(xT_ref,
                w0T_ref, b0T_ref,       # backbone: (H1, S) bf16, (H1, 1) f32
                wcatT_ref, bcatT_ref,   # fused head layer 1: (2*H2, H1) bf16, (2*H2, 1) f32
                wqT_ref, bqT_ref,       # fused head layer 2 + dueling combine: (A, 2*H2) bf16, (A, 1) f32
                outT_ref):              # (A, tb) f32
    xT = xT_ref[...]                    # (state_dim, tb) bf16 — batch on the lane axis
    cd = xT.dtype

    # Backbone (Linear + ReLU), f32 accumulate, bias broadcast over lanes.
    h = jnp.dot(w0T_ref[...], xT, preferred_element_type=jnp.float32) + b0T_ref[...]
    h = jnp.maximum(h, 0.0).astype(cd)                     # (H1, tb)

    # Fused value+advantage layer 1 (one MXU push instead of two half-wide ones).
    hcat = jnp.dot(wcatT_ref[...], h, preferred_element_type=jnp.float32) + bcatT_ref[...]
    hcat = jnp.maximum(hcat, 0.0).astype(cd)               # (2*H2, tb)

    # Fused layer 2 + dueling combine (block-diagonal weight pre-multiplied by the
    # combine matrix at prep time): q^T = Wq^T @ hcat^T + bq^T.
    # Lane axis = tb  ->  unmasked, lane-dense stores.
    outT_ref[...] = (jnp.dot(wqT_ref[...], hcat, preferred_element_type=jnp.float32)
                     + bqT_ref[...]).astype(outT_ref.dtype)


def fuse_params(params, action_dim, compute_dtype=jnp.bfloat16):
    """Fold the dueling head once, in f32, then cast matmul weights to bf16.

    Input params use PyTorch-style shapes already transposed to (in, out) / (1, out).
    Returns transposed (out, in) weights and (out, 1) biases for the lane-major kernel.
    """
    H2 = params["wv2"].shape[0]
    A = action_dim

    # Fused head layer-1: (H1, 2*H2), (1, 2*H2)
    wcat = jnp.concatenate([params["wv1"], params["wa1"]], axis=1)
    bcat = jnp.concatenate([params["bv1"], params["ba1"]], axis=1)

    # Block-diagonal head layer-2: (2*H2, 1+A) producing [v | a]
    top = jnp.concatenate([params["wv2"], jnp.zeros((H2, A), jnp.float32)], axis=1)
    bot = jnp.concatenate([jnp.zeros((H2, 1), jnp.float32), params["wa2"]], axis=1)
    w2_blk = jnp.concatenate([top, bot], axis=0)                  # (2*H2, 1+A)
    b2 = jnp.concatenate([params["bv2"], params["ba2"]], axis=1)  # (1, 1+A)

    # Dueling combine matrix C: q = [v | a] @ C with C[0,:] = 1, C[1:,:] = I - 1/A
    combine = jnp.concatenate(
        [jnp.ones((1, A), jnp.float32),
         jnp.eye(A, dtype=jnp.float32) - 1.0 / A], axis=0)        # (1+A, A)

    wq = w2_blk @ combine                                         # (2*H2, A) — folded in f32
    bq = b2 @ combine                                             # (1, A)

    return dict(
        w0T=params["w0"].T.astype(compute_dtype),      # (H1, S)
        b0T=params["b0"].T.astype(jnp.float32),        # (H1, 1)
        wcatT=wcat.T.astype(compute_dtype),            # (2*H2, H1)
        bcatT=bcat.T.astype(jnp.float32),              # (2*H2, 1)
        wqT=wq.T.astype(compute_dtype),                # (A, 2*H2)
        bqT=bq.T.astype(jnp.float32),                  # (A, 1)
    )


def _round_up(x, m):
    return ((x + m - 1) // m) * m


def _pick_batch_tile(B, target=1024, min_steps=2):
    """Batch is the lane axis: tiles must be multiples of 128 (or equal B).
    No 'divides B' requirement — pl.cdiv gives a ragged, masked last block."""
    if B <= 128:
        return B                          # single full-dim block (legal, lane-padded)
    tb = min(_round_up(target, 128), _round_up(B, 128))
    if min_steps > 1:
        # Aim for >= min_steps grid steps so v7x's 2 TensorCores both get work;
        # the extra ~0.35us per step is negligible on 1-TC chips.
        per_step = max(128, _round_up(pl.cdiv(B, min_steps), 128))
        tb = min(tb, per_step)
    return tb


def qnetwork_forward(x, fused, action_dim, tb=None):
    """x: (B, state_dim) float32. fused: output of fuse_params(). Returns (B, action_dim) f32."""
    B, state_dim = x.shape
    H1 = fused["w0T"].shape[0]
    H2x2 = fused["wcatT"].shape[0]
    if tb is None:
        tb = _pick_batch_tile(B)

    xT = x.T.astype(fused["w0T"].dtype)              # (state_dim, B) bf16, batch on lanes

    const2 = lambda i: (0, 0)                        # weights/biases pinned in VMEM

    flops = 2 * B * (state_dim * H1 + H1 * H2x2 + H2x2 * action_dim)
    param_bytes = sum(int(v.size) * v.dtype.itemsize for v in fused.values())
    bytes_accessed = int(xT.size) * xT.dtype.itemsize + B * action_dim * 4 + param_bytes

    qT = pl.pallas_call(
        qnet_kernel,
        out_shape=jax.ShapeDtypeStruct((action_dim, B), jnp.float32),
        grid=(pl.cdiv(B, tb),),
        in_specs=[
            pl.BlockSpec((state_dim, tb), lambda i: (0, i)),       # x^T: batch-tiled on lanes
            pl.BlockSpec((H1, state_dim), const2),                 # w0^T
            pl.BlockSpec((H1, 1), const2),                         # b0^T
            pl.BlockSpec((H2x2, H1), const2),                      # wcat^T
            pl.BlockSpec((H2x2, 1), const2),                       # bcat^T
            pl.BlockSpec((action_dim, H2x2), const2),              # wq^T
            pl.BlockSpec((action_dim, 1), const2),                 # bq^T
        ],
        out_specs=pl.BlockSpec((action_dim, tb), lambda i: (0, i)),
        compiler_params=pltpu.CompilerParams(
            dimension_semantics=("parallel",),   # megacore sharding of batch on v7x
        ),
        cost_estimate=pl.CostEstimate(flops=flops, transcendentals=0,
                                      bytes_accessed=bytes_accessed),
    )(xT, fused["w0T"], fused["b0T"], fused["wcatT"], fused["bcatT"],
      fused["wqT"], fused["bqT"])

    return qT.T                                                    # (B, action_dim)


def init_linear(key, fan_in, fan_out):
    """Deterministic init mimicking PyTorch nn.Linear default (uniform +-1/sqrt(fan_in)).
    Returns W as (in, out) and b as (1, out)."""
    kw, kb = jax.random.split(key)
    bound = 1.0 / jnp.sqrt(fan_in)
    w = jax.random.uniform(kw, (fan_in, fan_out), jnp.float32, -bound, bound)
    b = jax.random.uniform(kb, (1, fan_out), jnp.float32, -bound, bound)
    return w, b


def reference_forward(x, params):
    """Pure-JAX f32 reference of the PyTorch forward, for verification."""
    h = jax.nn.relu(x @ params["w0"] + params["b0"])
    hv = jax.nn.relu(h @ params["wv1"] + params["bv1"])
    v = hv @ params["wv2"] + params["bv2"]
    ha = jax.nn.relu(h @ params["wa1"] + params["ba1"])
    a = ha @ params["wa2"] + params["ba2"]
    return v + (a - a.mean(axis=-1, keepdims=True))


if __name__ == "__main__":
    # Architecture: state_dim=8, network_architecture=[64, 32], action_dim=4
    #   backbone:        Linear(8 -> 64) + ReLU
    #   value branch:    Linear(64 -> 32) + ReLU + Linear(32 -> 1)
    #   advantage branch Linear(64 -> 32) + ReLU + Linear(32 -> 4)
    state_dim, action_dim = 8, 4
    H1, H2 = 64, 32

    key = jax.random.PRNGKey(0)
    keys = jax.random.split(key, 6)

    w0, b0 = init_linear(keys[0], state_dim, H1)
    wv1, bv1 = init_linear(keys[1], H1, H2)
    wv2, bv2 = init_linear(keys[2], H2, 1)
    wa1, ba1 = init_linear(keys[3], H1, H2)
    wa2, ba2 = init_linear(keys[4], H2, action_dim)
    params = dict(w0=w0, b0=b0, wv1=wv1, bv1=bv1, wv2=wv2, bv2=bv2,
                  wa1=wa1, ba1=ba1, wa2=wa2, ba2=ba2)

    fused = fuse_params(params, action_dim)

    # Small demo batch (single block, grid=1).
    B = 8
    x = jax.random.normal(keys[5], (B, state_dim), jnp.float32)
    q = jax.block_until_ready(qnetwork_forward(x, fused, action_dim))
    q_ref = reference_forward(x, params)
    assert q.shape == (B, action_dim)
    err = float(jnp.max(jnp.abs(q - q_ref)))
    assert err < 5e-2, err   # bf16 weights -> loosened tolerance vs f32

    # Larger batches exercising the batch grid (2 steps) and the ragged last block.
    for B2 in (256, 200):
        x2 = jax.random.normal(jax.random.fold_in(key, B2), (B2, state_dim), jnp.float32)
        q2 = jax.block_until_ready(qnetwork_forward(x2, fused, action_dim))
        q2_ref = reference_forward(x2, params)
        assert q2.shape == (B2, action_dim)
        err2 = float(jnp.max(jnp.abs(q2 - q2_ref)))
        assert err2 < 5e-2, err2

    print("KERNEL_OK")
</pallas_src>

<mosaic_0001>
module attributes {stable_mosaic.version = 11 : i64} {
  func.func @qnet_kernel(%arg0: i32, %arg1: memref<8x8xbf16, #tpu.memory_space<vmem>>, %arg2: memref<64x8xbf16, #tpu.memory_space<vmem>>, %arg3: memref<64x1xf32, #tpu.memory_space<vmem>>, %arg4: memref<64x64xbf16, #tpu.memory_space<vmem>>, %arg5: memref<64x1xf32, #tpu.memory_space<vmem>>, %arg6: memref<4x64xbf16, #tpu.memory_space<vmem>>, %arg7: memref<4x1xf32, #tpu.memory_space<vmem>>, %arg8: memref<4x8xf32, #tpu.memory_space<vmem>>) attributes {dimension_semantics = [#tpu.dimension_semantics<parallel>], iteration_bounds = array<i64: 1>, scalar_prefetch = 0 : i64, scratch_operands = 0 : i64, tpu.core_type = #tpu.core_type<tc>, window_params = [{transform_indices = @transform_0, window_bounds = array<i64: 8, 8>}, {pipeline_mode = #tpu.pipeline_mode<synchronous>, transform_indices = @transform_1, window_bounds = array<i64: 64, 8>}, {pipeline_mode = #tpu.pipeline_mode<synchronous>, transform_indices = @transform_2, window_bounds = array<i64: 64, 1>}, {pipeline_mode = #tpu.pipeline_mode<synchronous>, transform_indices = @transform_3, window_bounds = array<i64: 64, 64>}, {pipeline_mode = #tpu.pipeline_mode<synchronous>, transform_indices = @transform_4, window_bounds = array<i64: 64, 1>}, {pipeline_mode = #tpu.pipeline_mode<synchronous>, transform_indices = @transform_5, window_bounds = array<i64: 4, 64>}, {pipeline_mode = #tpu.pipeline_mode<synchronous>, transform_indices = @transform_6, window_bounds = array<i64: 4, 1>}, {transform_indices = @transform_7, window_bounds = array<i64: 4, 8>}]} {
    %c0 = arith.constant 0 : index
    %c0_0 = arith.constant 0 : index
    %0 = vector.load %arg1[%c0, %c0_0] : memref<8x8xbf16, #tpu.memory_space<vmem>>, vector<8x8xbf16>
    %c0_1 = arith.constant 0 : index
    %c0_2 = arith.constant 0 : index
    %1 = vector.load %arg2[%c0_1, %c0_2] : memref<64x8xbf16, #tpu.memory_space<vmem>>, vector<64x8xbf16>
    %cst = arith.constant dense<0.000000e+00> : vector<64x8xf32>
    %2 = tpu.matmul %1, %0, %cst {dimension_numbers = #tpu.dot_dimension_numbers<[1], [0], [0], [1], [0, 0, 1, 1], [], []>} : vector<64x8xbf16>, vector<8x8xbf16>, vector<64x8xf32> -> vector<64x8xf32>
    %c0_3 = arith.constant 0 : index
    %c0_4 = arith.constant 0 : index
    %3 = vector.load %arg3[%c0_3, %c0_4] : memref<64x1xf32, #tpu.memory_space<vmem>>, vector<64x1xf32>
    %4 = vector.broadcast %3 : vector<64x1xf32> to vector<64x8xf32>
    %5 = arith.addf %2, %4 : vector<64x8xf32>
    %cst_5 = arith.constant 0.000000e+00 : f32
    %6 = vector.broadcast %cst_5 : f32 to vector<64x8xf32>
    %7 = arith.maximumf %5, %6 : vector<64x8xf32>
    %8 = arith.truncf %7 : vector<64x8xf32> to vector<64x8xbf16>
    %c0_6 = arith.constant 0 : index
    %c0_7 = arith.constant 0 : index
    %9 = vector.load %arg4[%c0_6, %c0_7] : memref<64x64xbf16, #tpu.memory_space<vmem>>, vector<64x64xbf16>
    %cst_8 = arith.constant dense<0.000000e+00> : vector<64x8xf32>
    %10 = tpu.matmul %9, %8, %cst_8 {dimension_numbers = #tpu.dot_dimension_numbers<[1], [0], [0], [1], [0, 0, 1, 1], [], []>} : vector<64x64xbf16>, vector<64x8xbf16>, vector<64x8xf32> -> vector<64x8xf32>
    %c0_9 = arith.constant 0 : index
    %c0_10 = arith.constant 0 : index
    %11 = vector.load %arg5[%c0_9, %c0_10] : memref<64x1xf32, #tpu.memory_space<vmem>>, vector<64x1xf32>
    %12 = vector.broadcast %11 : vector<64x1xf32> to vector<64x8xf32>
    %13 = arith.addf %10, %12 : vector<64x8xf32>
    %cst_11 = arith.constant 0.000000e+00 : f32
    %14 = vector.broadcast %cst_11 : f32 to vector<64x8xf32>
    %15 = arith.maximumf %13, %14 : vector<64x8xf32>
    %16 = arith.truncf %15 : vector<64x8xf32> to vector<64x8xbf16>
    %c0_12 = arith.constant 0 : index
    %c0_13 = arith.constant 0 : index
    %17 = vector.load %arg6[%c0_12, %c0_13] : memref<4x64xbf16, #tpu.memory_space<vmem>>, vector<4x64xbf16>
    %cst_14 = arith.constant dense<0.000000e+00> : vector<4x8xf32>
    %18 = tpu.matmul %17, %16, %cst_14 {dimension_numbers = #tpu.dot_dimension_numbers<[1], [0], [0], [1], [0, 0, 1, 1], [], []>} : vector<4x64xbf16>, vector<64x8xbf16>, vector<4x8xf32> -> vector<4x8xf32>
    %c0_15 = arith.constant 0 : index
    %c0_16 = arith.constant 0 : index
    %19 = vector.load %arg7[%c0_15, %c0_16] : memref<4x1xf32, #tpu.memory_space<vmem>>, vector<4x1xf32>
    %20 = vector.broadcast %19 : vector<4x1xf32> to vector<4x8xf32>
    %21 = arith.addf %18, %20 : vector<4x8xf32>
    %c0_17 = arith.constant 0 : index
    %c0_18 = arith.constant 0 : index
    %22 = vector.load %arg8[%c0_17, %c0_18] : memref<4x8xf32, #tpu.memory_space<vmem>>, vector<4x8xf32>
    tpu.vector_store %arg8[%c0_17, %c0_18], %21 {strides = array<i32>} : memref<4x8xf32, #tpu.memory_space<vmem>>, vector<4x8xf32>,
    return
  }
  func.func @transform_0(%arg0: i32) -> (i32, i32) {
    %c0_i32 = arith.constant 0 : i32
    %c0_i32_0 = arith.constant 0 : i32
    return %c0_i32, %arg0 : i32, i32
  }
  func.func @transform_1(%arg0: i32) -> (i32, i32) {
    %c0_i32 = arith.constant 0 : i32
    %c0_i32_0 = arith.constant 0 : i32
    %c0_i32_1 = arith.constant 0 : i32
    return %c0_i32, %c0_i32_0 : i32, i32
  }
  func.func @transform_2(%arg0: i32) -> (i32, i32) {
    %c0_i32 = arith.constant 0 : i32
    %c0_i32_0 = arith.constant 0 : i32
    %c0_i32_1 = arith.constant 0 : i32
    return %c0_i32, %c0_i32_0 : i32, i32
  }
  func.func @transform_3(%arg0: i32) -> (i32, i32) {
    %c0_i32 = arith.constant 0 : i32
    %c0_i32_0 = arith.constant 0 : i32
    %c0_i32_1 = arith.constant 0 : i32
    return %c0_i32, %c0_i32_0 : i32, i32
  }
  func.func @transform_4(%arg0: i32) -> (i32, i32) {
    %c0_i32 = arith.constant 0 : i32
    %c0_i32_0 = arith.constant 0 : i32
    %c0_i32_1 = arith.constant 0 : i32
    return %c0_i32, %c0_i32_0 : i32, i32
  }
  func.func @transform_5(%arg0: i32) -> (i32, i32) {
    %c0_i32 = arith.constant 0 : i32
    %c0_i32_0 = arith.constant 0 : i32
    %c0_i32_1 = arith.constant 0 : i32
    return %c0_i32, %c0_i32_0 : i32, i32
  }
  func.func @transform_6(%arg0: i32) -> (i32, i32) {
    %c0_i32 = arith.constant 0 : i32
    %c0_i32_0 = arith.constant 0 : i32
    %c0_i32_1 = arith.constant 0 : i32
    return %c0_i32, %c0_i32_0 : i32, i32
  }
  func.func @transform_7(%arg0: i32) -> (i32, i32) {
    %c0_i32 = arith.constant 0 : i32
    %c0_i32_0 = arith.constant 0 : i32
    return %c0_i32, %arg0 : i32, i32
  }
}

</mosaic_0001>

<llo_original>
// kernel: tpu_custom_call.1
$region0: #{tpu_custom_call.1}
  #allocation0 [shape = 'u32[]', space=smem, size = 0x4, offset = 0x4, fixed_abs, tag = 'smem constant byte address 0x4 - core index']
  #allocation1 [shape = 'u32[144,128]{1,0:T(1,128)}', space=vmem, size = 0x12000, scoped, tag = 'internal scratch']
  %s0 = inlined_call_operand.vmem [shape: bf16[8,8], index: 0, kind: input, shape index: {}]
  %s1 = inlined_call_operand.vmem [shape: bf16[64,8], index: 1, kind: input, shape index: {}]
  %s2 = inlined_call_operand.vmem [shape: f32[64,1], index: 2, kind: input, shape index: {}]
  %s3 = inlined_call_operand.vmem [shape: bf16[64,64], index: 3, kind: input, shape index: {}]
  %s4 = inlined_call_operand.vmem [shape: f32[64,1], index: 4, kind: input, shape index: {}]
  %s5 = inlined_call_operand.vmem [shape: bf16[4,64], index: 5, kind: input, shape index: {}]
  %s6 = inlined_call_operand.vmem [shape: f32[4,1], index: 6, kind: input, shape index: {}]
  %s7 = inlined_call_operand.hbm [shape: f32[4,8], index: 7, kind: output, shape index: {}]
  %s8 = sld [smem:[#allocation0]]
  $region38: #{tpu_custom_call.1} parent=0
    _
  %s10 = ssub.s32 1, %s8
  %s11 = scalar_select 0, %s10, %s8
  $region1: #{tpu_custom_call.1} parent=0
    #allocation2 [shape = 'u8[2048]{0}', space=vmem, size = 0x800, scoped, tag = 'output window, operand 0, single buffered']
    #allocation3 [shape = 's32[1]{0}', space=sflag, size = 0x4, scoped, tag = 'scoped memory for tpu_custom_call.1']
    %12 = vsyncpa [#allocation3], 0
    // Predicated region
    $region2: #{tpu_custom_call.1} parent=1 // pred_check
      _
    $region3: #{tpu_custom_call.1} parent=1 // pred_check_branch
      %14 = sbr.rel (0) target = $region5
    $region4: #{tpu_custom_call.1} parent=1 // pred_region
      _
    $region5: #{tpu_custom_call.1} parent=1 // pred_fallthru
      _
    // Predicated region
    $region6: #{tpu_custom_call.1} parent=1 // pred_check
      _
    $region7: #{tpu_custom_call.1} parent=1 // pred_check_branch
      %16 = sbr.rel (0) target = $region9
    $region8: #{tpu_custom_call.1} parent=1 // pred_region
      _
    $region9: #{tpu_custom_call.1} parent=1 // pred_fallthru
      _
    // Predicated region
    $region10: #{tpu_custom_call.1} parent=1 // pred_check
      _
    $region11: #{tpu_custom_call.1} parent=1 // pred_check_branch
      %18 = sbr.rel (0) target = $region13
    $region12: #{tpu_custom_call.1} parent=1 // pred_region
      _
    $region13: #{tpu_custom_call.1} parent=1 // pred_fallthru
      _
    // Predicated region
    $region14: #{tpu_custom_call.1} parent=1 // pred_check
      _
    $region15: #{tpu_custom_call.1} parent=1 // pred_check_branch
      %20 = sbr.rel (0) target = $region17
    $region16: #{tpu_custom_call.1} parent=1 // pred_region
      _
    $region17: #{tpu_custom_call.1} parent=1 // pred_fallthru
      _
    // Predicated region
    $region18: #{tpu_custom_call.1} parent=1 // pred_check
      _
    $region19: #{tpu_custom_call.1} parent=1 // pred_check_branch
      %22 = sbr.rel (0) target = $region21
    $region20: #{tpu_custom_call.1} parent=1 // pred_region
      _
    $region21: #{tpu_custom_call.1} parent=1 // pred_fallthru
      _
    // Predicated region
    $region22: #{tpu_custom_call.1} parent=1 // pred_check
      _
    $region23: #{tpu_custom_call.1} parent=1 // pred_check_branch
      %24 = sbr.rel (0) target = $region25
    $region24: #{tpu_custom_call.1} parent=1 // pred_region
      _
    $region25: #{tpu_custom_call.1} parent=1 // pred_fallthru
      _
    // Predicated region
    $region26: #{tpu_custom_call.1} parent=1 // pred_check
      _
    $region27: #{tpu_custom_call.1} parent=1 // pred_check_branch
      %26 = sbr.rel (0) target = $region29
    $region28: #{tpu_custom_call.1} parent=1 // pred_region
      _
    $region29: #{tpu_custom_call.1} parent=1 // pred_fallthru
      _
    %v28 = vld [vmem:[%s0] sm:$0xf]
    %v29 = vld [vmem:[%s1] sm:$0xf]
    %v30 = vld [vmem:[%s1 + $0x4] sm:$0xf]
    %v31 = vld [vmem:[%s1 + $0x8] sm:$0xf]
    %v32 = vld [vmem:[%s1 + $0xc] sm:$0xf]
    %v33 = vld [vmem:[%s1 + $0x10] sm:$0xf]
    %v34 = vld [vmem:[%s1 + $0x14] sm:$0xf]
    %v35 = vld [vmem:[%s1 + $0x18] sm:$0xf]
    %v36 = vld [vmem:[%s1 + $0x1c] sm:$0xf]
    %v37 = vld [vmem:[%s2] sm:$0xff]
    %v38 = vld [vmem:[%s2 + $0x8] sm:$0xff]
    %v39 = vld [vmem:[%s2 + $0x10] sm:$0xff]
    %v40 = vld [vmem:[%s2 + $0x18] sm:$0xff]
    %v41 = vld [vmem:[%s2 + $0x20] sm:$0xff]
    %v42 = vld [vmem:[%s2 + $0x28] sm:$0xff]
    %v43 = vld [vmem:[%s2 + $0x30] sm:$0xff]
    %v44 = vld [vmem:[%s2 + $0x38] sm:$0xff]
    %46 = vset.pattern.permute.xlu0 0
    %47 = vperm.xlu0 %46, %v37
    %v48 = vpop.permute.xlu0 %47
    %51 = vset.pattern.permute.xlu0 0
    %52 = vperm.xlu0 %51, %v38
    %v53 = vpop.permute.xlu0 %52
    %56 = vset.pattern.permute.xlu0 0
    %57 = vperm.xlu0 %56, %v39
    %v58 = vpop.permute.xlu0 %57
    %61 = vset.pattern.permute.xlu0 0
    %62 = vperm.xlu0 %61, %v40
    %v63 = vpop.permute.xlu0 %62
    %66 = vset.pattern.permute.xlu0 0
    %67 = vperm.xlu0 %66, %v41
    %v68 = vpop.permute.xlu0 %67
    %71 = vset.pattern.permute.xlu0 0
    %72 = vperm.xlu0 %71, %v42
    %v73 = vpop.permute.xlu0 %72
    %76 = vset.pattern.permute.xlu0 0
    %77 = vperm.xlu0 %76, %v43
    %v78 = vpop.permute.xlu0 %77
    %81 = vset.pattern.permute.xlu0 0
    %82 = vperm.xlu0 %81, %v44
    %v83 = vpop.permute.xlu0 %82
    %v93 = vunpack.c.l.b16 %v29
    %v94 = vunpack.c.l.b16 %v30
    %v95 = vunpack.c.l.b16 %v31
    %v96 = vunpack.c.l.b16 %v32
    %v97 = vunpack.c.l.b16 %v33
    %v98 = vunpack.c.l.b16 %v34
    %v99 = vunpack.c.l.b16 %v35
    %v100 = vunpack.c.l.b16 %v36
    %v101 = vpack.c.b16 %v94, %v93
    %v102 = vpack.c.b16 %v96, %v95
    %v103 = vpack.c.b16 %v98, %v97
    %v104 = vpack.c.b16 %v100, %v99
    %vm105 = vcmask 64512
    %v107 = vsel %vm105, %v101, 0
    %v110 = vsel %vm105, %v102, 0
    %v113 = vsel %vm105, %v103, 0
    %v116 = vsel %vm105, %v104, 0
    %vm118 = vcmask 1043456
    %v120 = vsel %vm118, %v28, 0
    %122 = vmatprep.subr.bf16.mxu0 0
    %123 = vmatpush1.bf16.msra.mxu0 %v120
    %124 = vmatprep.subr.bf16.mxu0 0
    %125 = vmatpush1.bf16.msra.mxu0 0
    %126 = vmatprep.subr.bf16.mxu0 0
    %127 = vmatpush1.bf16.msra.mxu0 0
    %128 = vmatprep.subr.bf16.mxu0 0
    %129 = vmatpush1.bf16.msra.mxu0 0
    %130 = vmatprep.subr.bf16.mxu0 0
    %131 = vmatpush1.bf16.msra.mxu0 0
    %132 = vmatprep.subr.bf16.mxu0 0
    %133 = vmatpush1.bf16.msra.mxu0 0
    %134 = vmatprep.subr.bf16.mxu0 0
    %135 = vmatpush1.bf16.msra.mxu0 0
    %136 = vmatprep.subr.bf16.mxu0 0
    %137 = vmatpush1.bf16.msra.mxu0 0
    %138 = vmatprep.subr.bf16.mxu0 0
    %139 = vmatpush1.bf16.msra.mxu0 0
    %140 = vmatprep.subr.bf16.mxu0 0
    %141 = vmatpush1.bf16.msra.mxu0 0
    %142 = vmatprep.subr.bf16.mxu0 0
    %143 = vmatpush1.bf16.msra.mxu0 0
    %144 = vmatprep.subr.bf16.mxu0 0
    %145 = vmatpush1.bf16.msra.mxu0 0
    %146 = vmatprep.subr.bf16.mxu0 0
    %147 = vmatpush1.bf16.msra.mxu0 0
    %148 = vmatprep.subr.bf16.mxu0 0
    %149 = vmatpush1.bf16.msra.mxu0 0
    %150 = vmatprep.subr.bf16.mxu0 0
    %151 = vmatpush1.bf16.msra.mxu0 0
    %152 = vmatprep.subr.bf16.mxu0 0
    %153 = vmatpush1.bf16.msra.mxu0 0
    %154 = vmatprep.mubr.bf16.mxu0 0
    %155 = vmatmul.mubr.bf16.gmra.mrb[0].mxu0 %v107
    %v156 = vpop.f32.mrb[0].mxu0
    %v157 = vadd.f32 %v48, %v156
    %v158 = vpop.f32.mrb[0].mxu0
    %v159 = vpop.f32.mrb[0].mxu0
    %v160 = vadd.f32 %v53, %v159
    %v161 = vpop.f32.mrb[0].mxu0
    %162 = vmatprep.mubr.bf16.mxu0 0
    %163 = vmatmul.mubr.bf16.gmra.mrb[0].mxu0 %v110
    %v164 = vpop.f32.mrb[0].mxu0
    %v165 = vadd.f32 %v58, %v164
    %v166 = vpop.f32.mrb[0].mxu0
    %v167 = vpop.f32.mrb[0].mxu0
    %v168 = vadd.f32 %v63, %v167
    %v169 = vpop.f32.mrb[0].mxu0
    %170 = vmatprep.mubr.bf16.mxu0 0
    %171 = vmatmul.mubr.bf16.gmra.mrb[0].mxu0 %v113
    %v172 = vpop.f32.mrb[0].mxu0
    %v173 = vadd.f32 %v68, %v172
    %v174 = vpop.f32.mrb[0].mxu0
    %v175 = vpop.f32.mrb[0].mxu0
    %v176 = vadd.f32 %v73, %v175
    %v177 = vpop.f32.mrb[0].mxu0
    %178 = vmatprep.mubr.bf16.mxu0 0
    %179 = vmatmul.mubr.bf16.gmra.mrb[0].mxu0 %v116
    %v180 = vpop.f32.mrb[0].mxu0
    %v181 = vadd.f32 %v78, %v180
    %v182 = vpop.f32.mrb[0].mxu0
    %v183 = vpop.f32.mrb[0].mxu0
    %v184 = vadd.f32 %v83, %v183
    %v185 = vpop.f32.mrb[0].mxu0
    %186 = vdwg.mxu0
    %v187 = vmax.f32 %v157, 0.0
    %v188 = vmax.f32 %v160, 0.0
    %v189 = vmax.f32 %v165, 0.0
    %v190 = vmax.f32 %v168, 0.0
    %v191 = vmax.f32 %v173, 0.0
    %v192 = vmax.f32 %v176, 0.0
    %v193 = vmax.f32 %v181, 0.0
    %v194 = vmax.f32 %v184, 0.0
    %v195 = vpack.c.bf16 %v188, %v187
    %v196 = vpack.c.bf16 %v190, %v189
    %v197 = vpack.c.bf16 %v192, %v191
    %v198 = vpack.c.bf16 %v194, %v193
    %v199 = vld [vmem:[%s3] sm:$0xf]
    %v200 = vld [vmem:[%s3 + $0x4] sm:$0xf]
    %v201 = vld [vmem:[%s3 + $0x8] sm:$0xf]
    %v202 = vld [vmem:[%s3 + $0xc] sm:$0xf]
    %v203 = vld [vmem:[%s3 + $0x10] sm:$0xf]
    %v204 = vld [vmem:[%s3 + $0x14] sm:$0xf]
    %v205 = vld [vmem:[%s3 + $0x18] sm:$0xf]
    %v206 = vld [vmem:[%s3 + $0x1c] sm:$0xf]
    %v207 = vld [vmem:[%s4] sm:$0xff]
    %v208 = vld [vmem:[%s4 + $0x8] sm:$0xff]
    %v209 = vld [vmem:[%s4 + $0x10] sm:$0xff]
    %v210 = vld [vmem:[%s4 + $0x18] sm:$0xff]
    %v211 = vld [vmem:[%s4 + $0x20] sm:$0xff]
    %v212 = vld [vmem:[%s4 + $0x28] sm:$0xff]
    %v213 = vld [vmem:[%s4 + $0x30] sm:$0xff]
    %v214 = vld [vmem:[%s4 + $0x38] sm:$0xff]
    %216 = vset.pattern.permute.xlu0 0
    %217 = vperm.xlu0 %216, %v207
    %v218 = vpop.permute.xlu0 %217
    %221 = vset.pattern.permute.xlu0 0
    %222 = vperm.xlu0 %221, %v208
    %v223 = vpop.permute.xlu0 %222
    %226 = vset.pattern.permute.xlu0 0
    %227 = vperm.xlu0 %226, %v209
    %v228 = vpop.permute.xlu0 %227
    %231 = vset.pattern.permute.xlu0 0
    %232 = vperm.xlu0 %231, %v210
    %v233 = vpop.permute.xlu0 %232
    %236 = vset.pattern.permute.xlu0 0
    %237 = vperm.xlu0 %236, %v211
    %v238 = vpop.permute.xlu0 %237
    %241 = vset.pattern.permute.xlu0 0
    %242 = vperm.xlu0 %241, %v212
    %v243 = vpop.permute.xlu0 %242
    %246 = vset.pattern.permute.xlu0 0
    %247 = vperm.xlu0 %246, %v213
    %v248 = vpop.permute.xlu0 %247
    %251 = vset.pattern.permute.xlu0 0
    %252 = vperm.xlu0 %251, %v214
    %v253 = vpop.permute.xlu0 %252
    %v263 = vunpack.c.l.b16 %v199
    %v264 = vunpack.c.l.b16 %v200
    %v265 = vunpack.c.l.b16 %v201
    %v266 = vunpack.c.l.b16 %v202
    %v267 = vunpack.c.l.b16 %v203
    %v268 = vunpack.c.l.b16 %v204
    %v269 = vunpack.c.l.b16 %v205
    %v270 = vunpack.c.l.b16 %v206
    %v271 = vpack.c.b16 %v264, %v263
    %v272 = vpack.c.b16 %v266, %v265
    %v273 = vpack.c.b16 %v268, %v267
    %v274 = vpack.c.b16 %v270, %v269
    %vm275 = vcmask 523264
    %v277 = vsel %vm275, %v271, 0
    %v280 = vsel %vm275, %v272, 0
    %v283 = vsel %vm275, %v273, 0
    %v286 = vsel %vm275, %v274, 0
    %288 = vmatprep.subr.bf16.mxu0 0
    %289 = vmatpush1.bf16.msra.mxu0 %v195
    %290 = vmatprep.subr.bf16.mxu0 0
    %291 = vmatpush1.bf16.msra.mxu0 %v196
    %292 = vmatprep.subr.bf16.mxu0 0
    %293 = vmatpush1.bf16.msra.mxu0 %v197
    %294 = vmatprep.subr.bf16.mxu0 0
    %295 = vmatpush1.bf16.msra.mxu0 %v198
    %296 = vmatprep.subr.bf16.mxu0 0
    %297 = vmatpush1.bf16.msra.mxu0 0
    %298 = vmatprep.subr.bf16.mxu0 0
    %299 = vmatpush1.bf16.msra.mxu0 0
    %300 = vmatprep.subr.bf16.mxu0 0
    %301 = vmatpush1.bf16.msra.mxu0 0
    %302 = vmatprep.subr.bf16.mxu0 0
    %303 = vmatpush1.bf16.msra.mxu0 0
    %304 = vmatprep.subr.bf16.mxu0 0
    %305 = vmatpush1.bf16.msra.mxu0 0
    %306 = vmatprep.subr.bf16.mxu0 0
    %307 = vmatpush1.bf16.msra.mxu0 0
    %308 = vmatprep.subr.bf16.mxu0 0
    %309 = vmatpush1.bf16.msra.mxu0 0
    %310 = vmatprep.subr.bf16.mxu0 0
    %311 = vmatpush1.bf16.msra.mxu0 0
    %312 = vmatprep.subr.bf16.mxu0 0
    %313 = vmatpush1.bf16.msra.mxu0 0
    %314 = vmatprep.subr.bf16.mxu0 0
    %315 = vmatpush1.bf16.msra.mxu0 0
    %316 = vmatprep.subr.bf16.mxu0 0
    %317 = vmatpush1.bf16.msra.mxu0 0
    %318 = vmatprep.subr.bf16.mxu0 0
    %319 = vmatpush1.bf16.msra.mxu0 0
    %320 = vmatprep.mubr.bf16.mxu0 0
    %321 = vmatmul.mubr.bf16.gmra.mrb[0].mxu0 %v277
    %v322 = vpop.f32.mrb[0].mxu0
    %v323 = vadd.f32 %v218, %v322
    %v324 = vpop.f32.mrb[0].mxu0
    %v325 = vpop.f32.mrb[0].mxu0
    %v326 = vadd.f32 %v223, %v325
    %v327 = vpop.f32.mrb[0].mxu0
    %328 = vmatprep.mubr.bf16.mxu0 0
    %329 = vmatmul.mubr.bf16.gmra.mrb[0].mxu0 %v280
    %v330 = vpop.f32.mrb[0].mxu0
    %v331 = vadd.f32 %v228, %v330
    %v332 = vpop.f32.mrb[0].mxu0
    %v333 = vpop.f32.mrb[0].mxu0
    %v334 = vadd.f32 %v233, %v333
    %v335 = vpop.f32.mrb[0].mxu0
    %336 = vmatprep.mubr.bf16.mxu0 0
    %337 = vmatmul.mubr.bf16.gmra.mrb[0].mxu0 %v283
    %v338 = vpop.f32.mrb[0].mxu0
    %v339 = vadd.f32 %v238, %v338
    %v340 = vpop.f32.mrb[0].mxu0
    %v341 = vpop.f32.mrb[0].mxu0
    %v342 = vadd.f32 %v243, %v341
    %v343 = vpop.f32.mrb[0].mxu0
    %344 = vmatprep.mubr.bf16.mxu0 0
    %345 = vmatmul.mubr.bf16.gmra.mrb[0].mxu0 %v286
    %v346 = vpop.f32.mrb[0].mxu0
    %v347 = vadd.f32 %v248, %v346
    %v348 = vpop.f32.mrb[0].mxu0
    %v349 = vpop.f32.mrb[0].mxu0
    %v350 = vadd.f32 %v253, %v349
    %v351 = vpop.f32.mrb[0].mxu0
    %352 = vdwg.mxu0
    %v353 = vmax.f32 %v323, 0.0
    %v354 = vmax.f32 %v326, 0.0
    %v355 = vmax.f32 %v331, 0.0
    %v356 = vmax.f32 %v334, 0.0
    %v357 = vmax.f32 %v339, 0.0
    %v358 = vmax.f32 %v342, 0.0
    %v359 = vmax.f32 %v347, 0.0
    %v360 = vmax.f32 %v350, 0.0
    %v361 = vpack.c.bf16 %v354, %v353
    %v362 = vpack.c.bf16 %v356, %v355
    %v363 = vpack.c.bf16 %v358, %v357
    %v364 = vpack.c.bf16 %v360, %v359
    %v365 = vld [vmem:[%s5] sm:$0x3]
    %v366 = vld [vmem:[%s6] sm:$0xf]
    %368 = vset.pattern.permute.xlu0 0
    %369 = vperm.xlu0 %368, %v366
    %v370 = vpop.permute.xlu0 %369
    %v373 = vsel %vm275, %v365, 0
    %375 = vmatprep.subr.bf16.mxu0 0
    %376 = vmatpush1.bf16.msra.mxu0 %v361
    %377 = vmatprep.subr.bf16.mxu0 0
    %378 = vmatpush1.bf16.msra.mxu0 %v362
    %379 = vmatprep.subr.bf16.mxu0 0
    %380 = vmatpush1.bf16.msra.mxu0 %v363
    %381 = vmatprep.subr.bf16.mxu0 0
    %382 = vmatpush1.bf16.msra.mxu0 %v364
    %383 = vmatprep.subr.bf16.mxu0 0
    %384 = vmatpush1.bf16.msra.mxu0 0
    %385 = vmatprep.subr.bf16.mxu0 0
    %386 = vmatpush1.bf16.msra.mxu0 0
    %387 = vmatprep.subr.bf16.mxu0 0
    %388 = vmatpush1.bf16.msra.mxu0 0
    %389 = vmatprep.subr.bf16.mxu0 0
    %390 = vmatpush1.bf16.msra.mxu0 0
    %391 = vmatprep.subr.bf16.mxu0 0
    %392 = vmatpush1.bf16.msra.mxu0 0
    %393 = vmatprep.subr.bf16.mxu0 0
    %394 = vmatpush1.bf16.msra.mxu0 0
    %395 = vmatprep.subr.bf16.mxu0 0
    %396 = vmatpush1.bf16.msra.mxu0 0
    %397 = vmatprep.subr.bf16.mxu0 0
    %398 = vmatpush1.bf16.msra.mxu0 0
    %399 = vmatprep.subr.bf16.mxu0 0
    %400 = vmatpush1.bf16.msra.mxu0 0
    %401 = vmatprep.subr.bf16.mxu0 0
    %402 = vmatpush1.bf16.msra.mxu0 0
    %403 = vmatprep.subr.bf16.mxu0 0
    %404 = vmatpush1.bf16.msra.mxu0 0
    %405 = vmatprep.subr.bf16.mxu0 0
    %406 = vmatpush1.bf16.msra.mxu0 0
    %407 = vmatprep.mubr.bf16.mxu0 0
    %408 = vmatmul.mubr.bf16.gmra.mrb[0].mxu0 %v373
    %v409 = vpop.f32.mrb[0].mxu0
    %v410 = vadd.f32 %v370, %v409
    %v411 = vpop.f32.mrb[0].mxu0
    %v412 = vpop.f32.mrb[0].mxu0
    %v413 = vpop.f32.mrb[0].mxu0
    %414 = vdwg.mxu0
    %vm415 = vcmask 60416
    %416 = vst.msk [vmem:[#allocation2] sm:$0xf] %vm415, %v410
    // Predicated region
    $region30: #{tpu_custom_call.1} parent=1 // pred_check
      _
    $region31: #{tpu_custom_call.1} parent=1 // pred_check_branch
      %418 = sbr.rel (0) target = $region33
    $region32: #{tpu_custom_call.1} parent=1 // pred_region
      %s420 = ssub.s32 64, 64
      %421 = vsyncadd [#allocation3], %s420
      %s423 = sshll.u32 [#allocation2], 4
      %s424 = int_to_ptr.vmem [resolvable:$true] %s423
      %426 = dma.vmem_to_hbm [thread:$0]  %s424, 64, %s7, [#allocation3]
    $region33: #{tpu_custom_call.1} parent=1 // pred_fallthru
      _
    // Predicated region
    $region34: #{tpu_custom_call.1} parent=1 // pred_check
      _
    $region35: #{tpu_custom_call.1} parent=1 // pred_check_branch
      %428 = sbr.rel (0) target = $region37
    $region36: #{tpu_custom_call.1} parent=1 // pred_region
      %429 = dma.done [#allocation3], 64
    $region37: #{tpu_custom_call.1} parent=1 // pred_fallthru
      _
    %430 = vsyncpa [#allocation3], 1

</llo_original>
